<compile_context>
chip_gen: v5e
topology: v5e:2x2
jax: 0.10.0
libtpu: 0.0.40
codegen_flags: <defaults>
</compile_context>

<pallas_src>
import jax
import jax.numpy as jnp
from jax.experimental import pallas as pl
from jax.experimental.pallas import tpu as pltpu


HIDDEN = 32        # hidden width fixed by the module (fc1 -> 32 -> 32 -> num_actions)
TB_MAX = 1024      # batch tile (lanes); multiple of 128, amortizes per-step overhead
NEG_BIG = -1e30    # bias for padded action rows -> exp underflows to exactly 0


def _round_up(x, m):
    return ((x + m - 1) // m) * m


def _policy_kernel(x_ref, w1_ref, b1_ref, w2_ref, b2_ref, w3_ref, b3_ref,
                   probs_ref, logits_ref):
    """One batch tile: X is (D_pad, TB), weights (out, in), outputs (A_pad, TB)."""
    x = x_ref[...]                                                    # (D_pad, TB) f32

    # fc1 + ReLU : (32, D_pad) @ (D_pad, TB) -> (32, TB)
    h1 = jnp.dot(w1_ref[...], x, preferred_element_type=jnp.float32) + b1_ref[...]
    h1 = jnp.maximum(h1, 0.0)

    # fc2 + ReLU : (32, 32) @ (32, TB) -> (32, TB)
    h2 = jnp.dot(w2_ref[...], h1, preferred_element_type=jnp.float32) + b2_ref[...]
    h2 = jnp.maximum(h2, 0.0)

    # fc3 logits : (A_pad, 32) @ (32, TB) -> (A_pad, TB); padded rows get -1e30 bias
    logits = jnp.dot(w3_ref[...], h2, preferred_element_type=jnp.float32) + b3_ref[...]
    logits_ref[...] = logits

    # numerically-stable softmax over the action axis (sublanes); batch stays on lanes
    m = jnp.max(logits, axis=0, keepdims=True)                        # (1, TB)
    e = jnp.exp(logits - m)                                           # (A_pad, TB); pad rows -> 0
    denom = jnp.sum(e, axis=0, keepdims=True)                         # (1, TB)
    probs_ref[...] = e * pl.reciprocal(denom, approx=True)            # EUP reciprocal


def pi_forward(states, params):
    """Returns (probs, logits), each of shape (batch, num_actions), float32."""
    states = jnp.asarray(states, jnp.float32)
    if states.ndim == 1:
        states = states[None, :]                                      # mimic unsqueeze(0)

    w1, b1, w2, b2, w3, b3 = params                                   # W: (out, in), b: (out, 1)
    B, D = states.shape
    A = w3.shape[0]

    # Pad sublane dims to multiples of 8 for unmasked loads/stores.
    D_pad = _round_up(D, 8)
    A_pad = _round_up(A, 8)

    # Batch tile: multiple of 128 lanes, capped so a tile stays tiny in VMEM.
    TB = min(TB_MAX, _round_up(B, 128))
    Bp = _round_up(B, TB)

    # Transposed, zero-padded state slab: (D_pad, Bp) with batch on the lane axis.
    xt = jnp.zeros((D_pad, Bp), jnp.float32).at[:D, :B].set(states.T)

    # Zero-pad fc1 input columns (exact: zero contraction contributions).
    w1p = w1 if D_pad == D else jnp.zeros((HIDDEN, D_pad), jnp.float32).at[:, :D].set(w1)
    # Pad fc3 rows; padded-action bias = -1e30 so softmax over padded rows is exact.
    if A_pad == A:
        w3p, b3p = w3, b3
    else:
        w3p = jnp.zeros((A_pad, HIDDEN), jnp.float32).at[:A, :].set(w3)
        b3p = jnp.full((A_pad, 1), NEG_BIG, jnp.float32).at[:A, :].set(b3)

    def batch_tiled(rows):
        return pl.BlockSpec((rows, TB), lambda i: (0, i))

    def resident(shape):
        # full-array block, constant index -> stays VMEM-resident across grid steps
        return pl.BlockSpec(shape, lambda i: (0, 0))

    probs_t, logits_t = pl.pallas_call(
        _policy_kernel,
        out_shape=(jax.ShapeDtypeStruct((A_pad, Bp), jnp.float32),
                   jax.ShapeDtypeStruct((A_pad, Bp), jnp.float32)),
        grid=(Bp // TB,),
        in_specs=[batch_tiled(D_pad),
                  resident(w1p.shape), resident(b1.shape),
                  resident(w2.shape), resident(b2.shape),
                  resident(w3p.shape), resident(b3p.shape)],
        out_specs=[batch_tiled(A_pad), batch_tiled(A_pad)],
        compiler_params=pltpu.CompilerParams(
            dimension_semantics=("parallel",)),                       # 2 TCs on v7x
    )(xt, w1p, b1, w2, b2, w3p, b3p)

    return probs_t[:A, :B].T, logits_t[:A, :B].T


def pi_forward_probs(states, params):
    """Equivalent of forward(return_prob=True)."""
    probs, _ = pi_forward(states, params)
    return probs


def pi_sample_action(key, states, params):
    """Equivalent of forward(return_prob=False): sample an action per row."""
    # TODO(synk): torch.multinomial has no in-kernel Pallas equivalent; sampling is
    # done with jax.random.categorical directly on the kernel's logits output.
    _, logits = pi_forward(states, params)
    return jax.random.categorical(key, logits, axis=-1)


def init_params(key, state_dims, num_actions):
    """Deterministic init matching nn.Linear's U(-1/sqrt(fan_in), 1/sqrt(fan_in)).

    Weights are stored in PyTorch nn.Linear layout (out_features, in_features);
    biases as (out_features, 1) so they broadcast over the lane (batch) axis.
    """
    def linear(k, fan_in, fan_out):
        kw, kb = jax.random.split(k)
        bound = 1.0 / jnp.sqrt(float(fan_in))
        w = jax.random.uniform(kw, (fan_out, fan_in), jnp.float32, -bound, bound)
        b = jax.random.uniform(kb, (fan_out, 1), jnp.float32, -bound, bound)
        return w, b

    k1, k2, k3 = jax.random.split(key, 3)
    w1, b1 = linear(k1, state_dims, HIDDEN)
    w2, b2 = linear(k2, HIDDEN, HIDDEN)
    w3, b3 = linear(k3, HIDDEN, num_actions)
    return (w1, b1, w2, b2, w3, b3)


def _reference_forward(states, params):
    """Pure-JAX reference of the PyTorch forward for correctness checks."""
    w1, b1, w2, b2, w3, b3 = params
    h1 = jnp.maximum(states @ w1.T + b1.T, 0.0)
    h2 = jnp.maximum(h1 @ w2.T + b2.T, 0.0)
    logits = h2 @ w3.T + b3.T
    return jax.nn.softmax(logits, axis=-1), logits


if __name__ == "__main__":
    key = jax.random.PRNGKey(0)
    k_param, k_state, k_sample = jax.random.split(key, 3)

    batch = 2
    state_dims = 4
    num_actions = 4

    params = init_params(k_param, state_dims, num_actions)
    states = jax.random.normal(k_state, (batch, state_dims), jnp.float32)

    probs, logits = jax.block_until_ready(pi_forward(states, params))
    ref_probs, ref_logits = _reference_forward(states, params)

    assert probs.shape == (batch, num_actions)
    assert logits.shape == (batch, num_actions)
    # rows sum to ~1 (approx=True reciprocal -> loosen tolerance slightly)
    assert bool(jnp.all(jnp.abs(jnp.sum(probs, axis=-1) - 1.0) < 5e-3))
    assert bool(jnp.all(jnp.abs(probs - ref_probs) < 5e-3))
    assert bool(jnp.all(jnp.abs(logits - ref_logits) < 1e-4))

    actions = jax.block_until_ready(pi_sample_action(k_sample, states, params))
    assert actions.shape == (batch,)
    assert bool(jnp.all((actions >= 0) & (actions < num_actions)))

    print("KERNEL_OK")
</pallas_src>

<mosaic_0001>
module attributes {stable_mosaic.version = 11 : i64} {
  func.func @_policy_kernel(%arg0: i32, %arg1: memref<8x128xf32, #tpu.memory_space<vmem>>, %arg2: memref<32x8xf32, #tpu.memory_space<vmem>>, %arg3: memref<32x1xf32, #tpu.memory_space<vmem>>, %arg4: memref<32x32xf32, #tpu.memory_space<vmem>>, %arg5: memref<32x1xf32, #tpu.memory_space<vmem>>, %arg6: memref<8x32xf32, #tpu.memory_space<vmem>>, %arg7: memref<8x1xf32, #tpu.memory_space<vmem>>, %arg8: memref<8x128xf32, #tpu.memory_space<vmem>>, %arg9: memref<8x128xf32, #tpu.memory_space<vmem>>) attributes {dimension_semantics = [#tpu.dimension_semantics<parallel>], iteration_bounds = array<i64: 1>, scalar_prefetch = 0 : i64, scratch_operands = 0 : i64, tpu.core_type = #tpu.core_type<tc>, window_params = [{transform_indices = @transform_0, window_bounds = array<i64: 8, 128>}, {pipeline_mode = #tpu.pipeline_mode<synchronous>, transform_indices = @transform_1, window_bounds = array<i64: 32, 8>}, {pipeline_mode = #tpu.pipeline_mode<synchronous>, transform_indices = @transform_2, window_bounds = array<i64: 32, 1>}, {pipeline_mode = #tpu.pipeline_mode<synchronous>, transform_indices = @transform_3, window_bounds = array<i64: 32, 32>}, {pipeline_mode = #tpu.pipeline_mode<synchronous>, transform_indices = @transform_4, window_bounds = array<i64: 32, 1>}, {pipeline_mode = #tpu.pipeline_mode<synchronous>, transform_indices = @transform_5, window_bounds = array<i64: 8, 32>}, {pipeline_mode = #tpu.pipeline_mode<synchronous>, transform_indices = @transform_6, window_bounds = array<i64: 8, 1>}, {transform_indices = @transform_7, window_bounds = array<i64: 8, 128>}, {transform_indices = @transform_8, window_bounds = array<i64: 8, 128>}]} {
    %c0 = arith.constant 0 : index
    %c0_0 = arith.constant 0 : index
    %0 = vector.load %arg1[%c0, %c0_0] : memref<8x128xf32, #tpu.memory_space<vmem>>, vector<8x128xf32>
    %c0_1 = arith.constant 0 : index
    %c0_2 = arith.constant 0 : index
    %1 = vector.load %arg2[%c0_1, %c0_2] : memref<32x8xf32, #tpu.memory_space<vmem>>, vector<32x8xf32>
    %cst = arith.constant dense<0.000000e+00> : vector<32x128xf32>
    %2 = tpu.matmul %1, %0, %cst {dimension_numbers = #tpu.dot_dimension_numbers<[1], [0], [0], [1], [0, 0, 1, 1], [], []>} : vector<32x8xf32>, vector<8x128xf32>, vector<32x128xf32> -> vector<32x128xf32>
    %c0_3 = arith.constant 0 : index
    %c0_4 = arith.constant 0 : index
    %3 = vector.load %arg3[%c0_3, %c0_4] : memref<32x1xf32, #tpu.memory_space<vmem>>, vector<32x1xf32>
    %4 = vector.broadcast %3 : vector<32x1xf32> to vector<32x128xf32>
    %5 = arith.addf %2, %4 : vector<32x128xf32>
    %cst_5 = arith.constant 0.000000e+00 : f32
    %6 = vector.broadcast %cst_5 : f32 to vector<32x128xf32>
    %7 = arith.maximumf %5, %6 : vector<32x128xf32>
    %c0_6 = arith.constant 0 : index
    %c0_7 = arith.constant 0 : index
    %8 = vector.load %arg4[%c0_6, %c0_7] : memref<32x32xf32, #tpu.memory_space<vmem>>, vector<32x32xf32>
    %cst_8 = arith.constant dense<0.000000e+00> : vector<32x128xf32>
    %9 = tpu.matmul %8, %7, %cst_8 {dimension_numbers = #tpu.dot_dimension_numbers<[1], [0], [0], [1], [0, 0, 1, 1], [], []>} : vector<32x32xf32>, vector<32x128xf32>, vector<32x128xf32> -> vector<32x128xf32>
    %c0_9 = arith.constant 0 : index
    %c0_10 = arith.constant 0 : index
    %10 = vector.load %arg5[%c0_9, %c0_10] : memref<32x1xf32, #tpu.memory_space<vmem>>, vector<32x1xf32>
    %11 = vector.broadcast %10 : vector<32x1xf32> to vector<32x128xf32>
    %12 = arith.addf %9, %11 : vector<32x128xf32>
    %cst_11 = arith.constant 0.000000e+00 : f32
    %13 = vector.broadcast %cst_11 : f32 to vector<32x128xf32>
    %14 = arith.maximumf %12, %13 : vector<32x128xf32>
    %c0_12 = arith.constant 0 : index
    %c0_13 = arith.constant 0 : index
    %15 = vector.load %arg6[%c0_12, %c0_13] : memref<8x32xf32, #tpu.memory_space<vmem>>, vector<8x32xf32>
    %cst_14 = arith.constant dense<0.000000e+00> : vector<8x128xf32>
    %16 = tpu.matmul %15, %14, %cst_14 {dimension_numbers = #tpu.dot_dimension_numbers<[1], [0], [0], [1], [0, 0, 1, 1], [], []>} : vector<8x32xf32>, vector<32x128xf32>, vector<8x128xf32> -> vector<8x128xf32>
    %c0_15 = arith.constant 0 : index
    %c0_16 = arith.constant 0 : index
    %17 = vector.load %arg7[%c0_15, %c0_16] : memref<8x1xf32, #tpu.memory_space<vmem>>, vector<8x1xf32>
    %18 = vector.broadcast %17 : vector<8x1xf32> to vector<8x128xf32>
    %19 = arith.addf %16, %18 : vector<8x128xf32>
    %c0_17 = arith.constant 0 : index
    %c0_18 = arith.constant 0 : index
    %20 = vector.load %arg9[%c0_17, %c0_18] : memref<8x128xf32, #tpu.memory_space<vmem>>, vector<8x128xf32>
    tpu.vector_store %arg9[%c0_17, %c0_18], %19 {strides = array<i32>} : memref<8x128xf32, #tpu.memory_space<vmem>>, vector<8x128xf32>,
    %cst_19 = arith.constant dense<0xFF800000> : vector<128xf32>
    %21 = vector.multi_reduction <maximumf>, %19, %cst_19 [0] : vector<8x128xf32> to vector<128xf32>
    %22 = vector.shape_cast %21 : vector<128xf32> to vector<1x128xf32>
    %23 = vector.broadcast %22 : vector<1x128xf32> to vector<8x128xf32>
    %24 = arith.subf %19, %23 : vector<8x128xf32>
    %25 = math.exp %24 : vector<8x128xf32>
    %cst_20 = arith.constant dense<0.000000e+00> : vector<128xf32>
    %26 = vector.multi_reduction <add>, %25, %cst_20 [0] : vector<8x128xf32> to vector<128xf32>
    %27 = vector.shape_cast %26 : vector<128xf32> to vector<1x128xf32>
    %28 = tpu.reciprocal %27 {approx = true} : vector<1x128xf32> -> vector<1x128xf32>
    %29 = vector.broadcast %28 : vector<1x128xf32> to vector<8x128xf32>
    %30 = arith.mulf %25, %29 : vector<8x128xf32>
    %c0_21 = arith.constant 0 : index
    %c0_22 = arith.constant 0 : index
    %31 = vector.load %arg8[%c0_21, %c0_22] : memref<8x128xf32, #tpu.memory_space<vmem>>, vector<8x128xf32>
    tpu.vector_store %arg8[%c0_21, %c0_22], %30 {strides = array<i32>} : memref<8x128xf32, #tpu.memory_space<vmem>>, vector<8x128xf32>,
    return
  }
  func.func @transform_0(%arg0: i32) -> (i32, i32) {
    %c0_i32 = arith.constant 0 : i32
    %c0_i32_0 = arith.constant 0 : i32
    return %c0_i32, %arg0 : i32, i32
  }
  func.func @transform_1(%arg0: i32) -> (i32, i32) {
    %c0_i32 = arith.constant 0 : i32
    %c0_i32_0 = arith.constant 0 : i32
    %c0_i32_1 = arith.constant 0 : i32
    return %c0_i32, %c0_i32_0 : i32, i32
  }
  func.func @transform_2(%arg0: i32) -> (i32, i32) {
    %c0_i32 = arith.constant 0 : i32
    %c0_i32_0 = arith.constant 0 : i32
    %c0_i32_1 = arith.constant 0 : i32
    return %c0_i32, %c0_i32_0 : i32, i32
  }
  func.func @transform_3(%arg0: i32) -> (i32, i32) {
    %c0_i32 = arith.constant 0 : i32
    %c0_i32_0 = arith.constant 0 : i32
    %c0_i32_1 = arith.constant 0 : i32
    return %c0_i32, %c0_i32_0 : i32, i32
  }
  func.func @transform_4(%arg0: i32) -> (i32, i32) {
    %c0_i32 = arith.constant 0 : i32
    %c0_i32_0 = arith.constant 0 : i32
    %c0_i32_1 = arith.constant 0 : i32
    return %c0_i32, %c0_i32_0 : i32, i32
  }
  func.func @transform_5(%arg0: i32) -> (i32, i32) {
    %c0_i32 = arith.constant 0 : i32
    %c0_i32_0 = arith.constant 0 : i32
    %c0_i32_1 = arith.constant 0 : i32
    return %c0_i32, %c0_i32_0 : i32, i32
  }
  func.func @transform_6(%arg0: i32) -> (i32, i32) {
    %c0_i32 = arith.constant 0 : i32
    %c0_i32_0 = arith.constant 0 : i32
    %c0_i32_1 = arith.constant 0 : i32
    return %c0_i32, %c0_i32_0 : i32, i32
  }
  func.func @transform_7(%arg0: i32) -> (i32, i32) {
    %c0_i32 = arith.constant 0 : i32
    %c0_i32_0 = arith.constant 0 : i32
    return %c0_i32, %arg0 : i32, i32
  }
  func.func @transform_8(%arg0: i32) -> (i32, i32) {
    %c0_i32 = arith.constant 0 : i32
    %c0_i32_0 = arith.constant 0 : i32
    return %c0_i32, %arg0 : i32, i32
  }
}

</mosaic_0001>

<llo_original>
// kernel: tpu_custom_call.1
$region0: #{tpu_custom_call.1}
  #allocation0 [shape = 'u32[]', space=smem, size = 0x4, offset = 0x4, fixed_abs, tag = 'smem constant byte address 0x4 - core index']
  #allocation1 [shape = 'u32[72,128]{1,0:T(1,128)}', space=vmem, size = 0x9000, scoped, tag = 'internal scratch']
  %s0 = inlined_call_operand.vmem [shape: f32[8,128], index: 0, kind: input, shape index: {}]
  %s1 = inlined_call_operand.vmem [shape: f32[32,8], index: 1, kind: input, shape index: {}]
  %s2 = inlined_call_operand.vmem [shape: f32[32,1], index: 2, kind: input, shape index: {}]
  %s3 = inlined_call_operand.vmem [shape: f32[32,32], index: 3, kind: input, shape index: {}]
  %s4 = inlined_call_operand.vmem [shape: f32[32,1], index: 4, kind: input, shape index: {}]
  %s5 = inlined_call_operand.vmem [shape: f32[8,32], index: 5, kind: input, shape index: {}]
  %s6 = inlined_call_operand.vmem [shape: f32[8,1], index: 6, kind: input, shape index: {}]
  %s7 = inlined_call_operand.hbm [shape: f32[8,128], index: 7, kind: output, shape index: {0}]
  %s8 = inlined_call_operand.hbm [shape: f32[8,128], index: 8, kind: output, shape index: {1}]
  %9 = xla_tuple %s7, %s8
  %s10 = sld [smem:[#allocation0]]
  $region46: #{tpu_custom_call.1} parent=0
    _
  %s12 = ssub.s32 1, %s10
  %s13 = scalar_select 0, %s12, %s10
  $region1: #{tpu_custom_call.1} parent=0
    #allocation2 [shape = 'u8[4096]{0}', space=vmem, size = 0x1000, scoped, tag = 'output window, operand 0, single buffered']
    #allocation3 [shape = 's32[1]{0}', space=sflag, size = 0x4, scoped, tag = 'scoped memory for tpu_custom_call.1']
    #allocation4 [shape = 'u8[4096]{0}', space=vmem, size = 0x1000, scoped, tag = 'output window, operand 1, single buffered']
    #allocation5 [shape = 's32[1]{0}', space=sflag, size = 0x4, scoped, tag = 'scoped memory for tpu_custom_call.1']
    %14 = vsyncpa [#allocation3], 0
    %15 = vsyncpa [#allocation5], 0
    // Predicated region
    $region2: #{tpu_custom_call.1} parent=1 // pred_check
      _
    $region3: #{tpu_custom_call.1} parent=1 // pred_check_branch
      %17 = sbr.rel (0) target = $region5
    $region4: #{tpu_custom_call.1} parent=1 // pred_region
      _
    $region5: #{tpu_custom_call.1} parent=1 // pred_fallthru
      _
    // Predicated region
    $region6: #{tpu_custom_call.1} parent=1 // pred_check
      _
    $region7: #{tpu_custom_call.1} parent=1 // pred_check_branch
      %19 = sbr.rel (0) target = $region9
    $region8: #{tpu_custom_call.1} parent=1 // pred_region
      _
    $region9: #{tpu_custom_call.1} parent=1 // pred_fallthru
      _
    // Predicated region
    $region10: #{tpu_custom_call.1} parent=1 // pred_check
      _
    $region11: #{tpu_custom_call.1} parent=1 // pred_check_branch
      %21 = sbr.rel (0) target = $region13
    $region12: #{tpu_custom_call.1} parent=1 // pred_region
      _
    $region13: #{tpu_custom_call.1} parent=1 // pred_fallthru
      _
    // Predicated region
    $region14: #{tpu_custom_call.1} parent=1 // pred_check
      _
    $region15: #{tpu_custom_call.1} parent=1 // pred_check_branch
      %23 = sbr.rel (0) target = $region17
    $region16: #{tpu_custom_call.1} parent=1 // pred_region
      _
    $region17: #{tpu_custom_call.1} parent=1 // pred_fallthru
      _
    // Predicated region
    $region18: #{tpu_custom_call.1} parent=1 // pred_check
      _
    $region19: #{tpu_custom_call.1} parent=1 // pred_check_branch
      %25 = sbr.rel (0) target = $region21
    $region20: #{tpu_custom_call.1} parent=1 // pred_region
      _
    $region21: #{tpu_custom_call.1} parent=1 // pred_fallthru
      _
    // Predicated region
    $region22: #{tpu_custom_call.1} parent=1 // pred_check
      _
    $region23: #{tpu_custom_call.1} parent=1 // pred_check_branch
      %27 = sbr.rel (0) target = $region25
    $region24: #{tpu_custom_call.1} parent=1 // pred_region
      _
    $region25: #{tpu_custom_call.1} parent=1 // pred_fallthru
      _
    // Predicated region
    $region26: #{tpu_custom_call.1} parent=1 // pred_check
      _
    $region27: #{tpu_custom_call.1} parent=1 // pred_check_branch
      %29 = sbr.rel (0) target = $region29
    $region28: #{tpu_custom_call.1} parent=1 // pred_region
      _
    $region29: #{tpu_custom_call.1} parent=1 // pred_fallthru
      _
    %v30 = vld [vmem:[%s0] sm:$0xff]
    %v31 = vld [vmem:[%s1] sm:$0xff]
    %v32 = vld [vmem:[%s1 + $0x8] sm:$0xff]
    %v33 = vld [vmem:[%s1 + $0x10] sm:$0xff]
    %v34 = vld [vmem:[%s1 + $0x18] sm:$0xff]
    %v35 = vld [vmem:[%s2] sm:$0xff]
    %v36 = vld [vmem:[%s2 + $0x8] sm:$0xff]
    %v37 = vld [vmem:[%s2 + $0x10] sm:$0xff]
    %v38 = vld [vmem:[%s2 + $0x18] sm:$0xff]
    %40 = vset.pattern.permute.xlu0 0
    %41 = vperm.xlu0 %40, %v35
    %v42 = vpop.permute.xlu0 %41
    %45 = vset.pattern.permute.xlu0 0
    %46 = vperm.xlu0 %45, %v36
    %v47 = vpop.permute.xlu0 %46
    %50 = vset.pattern.permute.xlu0 0
    %51 = vperm.xlu0 %50, %v37
    %v52 = vpop.permute.xlu0 %51
    %55 = vset.pattern.permute.xlu0 0
    %56 = vperm.xlu0 %55, %v38
    %v57 = vpop.permute.xlu0 %56
    %vm59 = vcmask 64512
    %v61 = vsel %vm59, %v31, 0
    %v64 = vsel %vm59, %v32, 0
    %v67 = vsel %vm59, %v33, 0
    %v70 = vsel %vm59, %v34, 0
    %72 = vmatpush.msra.mxu0 0.0
    %73 = vmatpush.msra.mxu0 0.0
    %74 = vmatpush.msra.mxu0 0.0
    %75 = vmatpush.msra.mxu0 0.0
    %76 = vmatpush.msra.mxu0 0.0
    %77 = vmatpush.msra.mxu0 0.0
    %78 = vmatpush.msra.mxu0 0.0
    %79 = vmatpush.msra.mxu0 0.0
    %80 = vmatpush.msra.mxu0 0.0
    %81 = vmatpush.msra.mxu0 0.0
    %82 = vmatpush.msra.mxu0 0.0
    %83 = vmatpush.msra.mxu0 0.0
    %84 = vmatpush.msra.mxu0 0.0
    %85 = vmatpush.msra.mxu0 0.0
    %86 = vmatpush.msra.mxu0 0.0
    %87 = vmatpush.msra.mxu0 %v30
    %88 = vmatmul.f32.gmra.mxu0 %v61
    %v89 = vpop.f32.mrf.mxu0
    %v90 = vadd.f32 %v42, %v89
    %91 = vmatmul.f32.gmra.mxu0 %v64
    %v92 = vpop.f32.mrf.mxu0
    %v93 = vadd.f32 %v47, %v92
    %94 = vmatmul.f32.gmra.mxu0 %v67
    %v95 = vpop.f32.mrf.mxu0
    %v96 = vadd.f32 %v52, %v95
    %97 = vmatmul.f32.gmra.mxu0 %v70
    %v98 = vpop.f32.mrf.mxu0
    %v99 = vadd.f32 %v57, %v98
    %100 = vdwg.mxu0
    %v101 = vmax.f32 %v90, 0.0
    %v102 = vmax.f32 %v93, 0.0
    %v103 = vmax.f32 %v96, 0.0
    %v104 = vmax.f32 %v99, 0.0
    %v105 = vld [vmem:[%s3] sm:$0xff]
    %v106 = vld [vmem:[%s3 + $0x8] sm:$0xff]
    %v107 = vld [vmem:[%s3 + $0x10] sm:$0xff]
    %v108 = vld [vmem:[%s3 + $0x18] sm:$0xff]
    %v109 = vld [vmem:[%s4] sm:$0xff]
    %v110 = vld [vmem:[%s4 + $0x8] sm:$0xff]
    %v111 = vld [vmem:[%s4 + $0x10] sm:$0xff]
    %v112 = vld [vmem:[%s4 + $0x18] sm:$0xff]
    %114 = vset.pattern.permute.xlu0 0
    %115 = vperm.xlu0 %114, %v109
    %v116 = vpop.permute.xlu0 %115
    %119 = vset.pattern.permute.xlu0 0
    %120 = vperm.xlu0 %119, %v110
    %v121 = vpop.permute.xlu0 %120
    %124 = vset.pattern.permute.xlu0 0
    %125 = vperm.xlu0 %124, %v111
    %v126 = vpop.permute.xlu0 %125
    %129 = vset.pattern.permute.xlu0 0
    %130 = vperm.xlu0 %129, %v112
    %v131 = vpop.permute.xlu0 %130
    %vm133 = vcmask 261120
    %v135 = vsel %vm133, %v105, 0
    %v138 = vsel %vm133, %v106, 0
    %v141 = vsel %vm133, %v107, 0
    %v144 = vsel %vm133, %v108, 0
    %146 = vmatpush.msra.mxu0 0.0
    %147 = vmatpush.msra.mxu0 0.0
    %148 = vmatpush.msra.mxu0 0.0
    %149 = vmatpush.msra.mxu0 0.0
    %150 = vmatpush.msra.mxu0 0.0
    %151 = vmatpush.msra.mxu0 0.0
    %152 = vmatpush.msra.mxu0 0.0
    %153 = vmatpush.msra.mxu0 0.0
    %154 = vmatpush.msra.mxu0 0.0
    %155 = vmatpush.msra.mxu0 0.0
    %156 = vmatpush.msra.mxu0 0.0
    %157 = vmatpush.msra.mxu0 0.0
    %158 = vmatpush.msra.mxu0 %v104
    %159 = vmatpush.msra.mxu0 %v103
    %160 = vmatpush.msra.mxu0 %v102
    %161 = vmatpush.msra.mxu0 %v101
    %162 = vmatmul.f32.gmra.mxu0 %v135
    %v163 = vpop.f32.mrf.mxu0
    %v164 = vadd.f32 %v116, %v163
    %165 = vmatmul.f32.gmra.mxu0 %v138
    %v166 = vpop.f32.mrf.mxu0
    %v167 = vadd.f32 %v121, %v166
    %168 = vmatmul.f32.gmra.mxu0 %v141
    %v169 = vpop.f32.mrf.mxu0
    %v170 = vadd.f32 %v126, %v169
    %171 = vmatmul.f32.gmra.mxu0 %v144
    %v172 = vpop.f32.mrf.mxu0
    %v173 = vadd.f32 %v131, %v172
    %174 = vdwg.mxu0
    %v175 = vmax.f32 %v164, 0.0
    %v176 = vmax.f32 %v167, 0.0
    %v177 = vmax.f32 %v170, 0.0
    %v178 = vmax.f32 %v173, 0.0
    %v179 = vld [vmem:[%s5] sm:$0xff]
    %v180 = vld [vmem:[%s6] sm:$0xff]
    %182 = vset.pattern.permute.xlu0 0
    %183 = vperm.xlu0 %182, %v180
    %v184 = vpop.permute.xlu0 %183
    %v187 = vsel %vm133, %v179, 0
    %189 = vmatpush.msra.mxu0 0.0
    %190 = vmatpush.msra.mxu0 0.0
    %191 = vmatpush.msra.mxu0 0.0
    %192 = vmatpush.msra.mxu0 0.0
    %193 = vmatpush.msra.mxu0 0.0
    %194 = vmatpush.msra.mxu0 0.0
    %195 = vmatpush.msra.mxu0 0.0
    %196 = vmatpush.msra.mxu0 0.0
    %197 = vmatpush.msra.mxu0 0.0
    %198 = vmatpush.msra.mxu0 0.0
    %199 = vmatpush.msra.mxu0 0.0
    %200 = vmatpush.msra.mxu0 0.0
    %201 = vmatpush.msra.mxu0 %v178
    %202 = vmatpush.msra.mxu0 %v177
    %203 = vmatpush.msra.mxu0 %v176
    %204 = vmatpush.msra.mxu0 %v175
    %205 = vmatmul.f32.gmra.mxu0 %v187
    %v206 = vpop.f32.mrf.mxu0
    %v207 = vadd.f32 %v184, %v206
    %208 = vdwg.mxu0
    %209 = vst [vmem:[#allocation4] sm:$0xff] %v207
    %v210 = vrot.slane %v207, 4
    %v211 = vmax.f32 %v207, %v210
    %v212 = vrot.slane %v211, 2
    %v213 = vmax.f32 %v211, %v212
    %v214 = vrot.slane %v213, 1
    %v215 = vmax.f32 %v213, %v214
    %v216 = vsub.f32 %v207, %v215
    %v217 = vmul.f32 %v216, 1.442695
    %v218 = vpow.pop %v217
    %v219 = vrot.slane %v218, 4
    %v220 = vadd.f32 %v218, %v219
    %v221 = vrot.slane %v220, 2
    %v222 = vadd.f32 %v220, %v221
    %v223 = vrot.slane %v222, 1
    %v224 = vadd.f32 %v222, %v223
    %v225 = vrcp.pop %v224
    %v226 = vmul.f32 %v218, %v225
    %227 = vst [vmem:[#allocation2] sm:$0xff] %v226
    // Predicated region
    $region30: #{tpu_custom_call.1} parent=1 // pred_check
      _
    $region31: #{tpu_custom_call.1} parent=1 // pred_check_branch
      %229 = sbr.rel (0) target = $region33
    $region32: #{tpu_custom_call.1} parent=1 // pred_region
      %231 = vsyncadd [#allocation3], 0
      %s233 = sshll.u32 [#allocation2], 4
      %s234 = int_to_ptr.vmem [resolvable:$true] %s233
      %s235 = sshll.u32 %s7, 4
      %s236 = int_to_ptr.hbm [resolvable:$true] %s235
      %238 = dma.vmem_to_hbm [thread:$0]  %s234, 128, %s236, [#allocation3]
    $region33: #{tpu_custom_call.1} parent=1 // pred_fallthru
      _
    // Predicated region
    $region34: #{tpu_custom_call.1} parent=1 // pred_check
      _
    $region35: #{tpu_custom_call.1} parent=1 // pred_check_branch
      %240 = sbr.rel (0) target = $region37
    $region36: #{tpu_custom_call.1} parent=1 // pred_region
      %242 = vsyncadd [#allocation5], 0
      %s244 = sshll.u32 [#allocation4], 4
      %s245 = int_to_ptr.vmem [resolvable:$true] %s244
      %s246 = sshll.u32 %s8, 4
      %s247 = int_to_ptr.hbm [resolvable:$true] %s246
      %249 = dma.vmem_to_hbm [thread:$0]  %s245, 128, %s247, [#allocation5]
    $region37: #{tpu_custom_call.1} parent=1 // pred_fallthru
      _
    // Predicated region
    $region38: #{tpu_custom_call.1} parent=1 // pred_check
      _
    $region39: #{tpu_custom_call.1} parent=1 // pred_check_branch
      %251 = sbr.rel (0) target = $region41
    $region40: #{tpu_custom_call.1} parent=1 // pred_region
      %253 = dma.done [#allocation3], 128
    $region41: #{tpu_custom_call.1} parent=1 // pred_fallthru
      _
    // Predicated region
    $region42: #{tpu_custom_call.1} parent=1 // pred_check
      _
    $region43: #{tpu_custom_call.1} parent=1 // pred_check_branch
      %255 = sbr.rel (0) target = $region45
    $region44: #{tpu_custom_call.1} parent=1 // pred_region
      %257 = dma.done [#allocation5], 128
    $region45: #{tpu_custom_call.1} parent=1 // pred_fallthru
      _
    %258 = vsyncpa [#allocation3], 1
    %259 = vsyncpa [#allocation5], 1

</llo_original>
